<compile_context>
chip_gen: v7x
topology: tpu7x:2x2x1
jax: 0.10.0
libtpu: 0.0.40
codegen_flags: <defaults>
</compile_context>

<pallas_src>
import jax
import jax.numpy as jnp
from jax.experimental import pallas as pl
from jax.experimental.pallas import tpu as pltpu


def attention_head_kernel(seq_ref, wq_ref, bq_ref, wk_ref, wv_ref, bv_ref,
                          bk_ref, out_ref):
    Bb, T, H = seq_ref.shape
    x3 = seq_ref[...]                               # (Bb, T, H)
    x2 = x3.reshape(Bb * T, H)                      # flatten batch into matmul M dim

    # q projection (MXU, f32 accumulate) + tanh (EUP)
    qh2 = jnp.tanh(
        jnp.dot(x2, wq_ref[...], preferred_element_type=jnp.float32)
        + bq_ref[...])                              # (Bb*T, H)
    qh3 = qh2.reshape(Bb, T, H)

    # k projection -> one score per timestep: VPU multiply + lane reduction
    # (an MXU matmul with N=1 would waste the whole systolic array).
    score = jnp.sum(qh3 * wk_ref[...], axis=-1, keepdims=True) + bk_ref[0]  # (Bb,T,1)

    # softmax over the sequence axis (PyTorch dim=1), numerically stabilized
    score = score - jnp.max(score, axis=1, keepdims=True)
    e = jnp.exp(score)
    attn = e * pl.reciprocal(jnp.sum(e, axis=1, keepdims=True), approx=True)

    # weight the sequence and apply the v projection (MXU, f32 accumulate)
    y2 = (attn * x3).reshape(Bb * T, H)
    out = jnp.dot(y2, wv_ref[...], preferred_element_type=jnp.float32) \
          + bv_ref[...]                             # (Bb*T, H)

    out_ref[...] = out.reshape(Bb, T, H).astype(out_ref.dtype)


def _choose_batch_block(B, T, H, target_rows=256, vmem_tile_budget=8 << 20):
    """Largest divisor of B whose f32 (Bb, T, H) tile fits the VMEM budget
    (x4: in+out, double-buffered); stop once Bb*T reaches an MXU-sized M."""
    best = 1
    for d in range(1, B + 1):
        if B % d:
            continue
        if 4 * d * T * H * 4 > vmem_tile_budget:
            break
        best = d
        if d * T >= target_rows:
            break
    return best


def attention_head(seq, wq, bq, wk, bk, wv, bv):
    """seq: (B, T, H).  Weights in PyTorch nn.Linear layout:
       wq: (H, H)  bq: (H,)   wk: (1, H)  bk: (1,)   wv: (H, H)  bv: (H,)."""
    B, T, H = seq.shape
    Bb = _choose_batch_block(B, T, H)

    wq_t = wq.T                      # (in, out) so the kernel computes x @ W + b
    wv_t = wv.T
    wk_row = wk.reshape(1, H)        # lane-aligned row for the VPU reduce
    bq2 = bq.reshape(1, H)
    bv2 = bv.reshape(1, H)
    bk1 = bk.reshape(1,)             # scalar -> SMEM

    const2 = lambda b: (0, 0)
    return pl.pallas_call(
        attention_head_kernel,
        out_shape=jax.ShapeDtypeStruct((B, T, H), seq.dtype),
        grid=(B // Bb,),
        in_specs=[
            pl.BlockSpec((Bb, T, H), lambda b: (b, 0, 0)),            # seq
            pl.BlockSpec((H, H), const2),                             # Wq^T
            pl.BlockSpec((1, H), const2),                             # bq
            pl.BlockSpec((1, H), const2),                             # wk row
            pl.BlockSpec((H, H), const2),                             # Wv^T
            pl.BlockSpec((1, H), const2),                             # bv
            pl.BlockSpec(memory_space=pltpu.MemorySpace.SMEM),        # bk scalar
        ],
        out_specs=pl.BlockSpec((Bb, T, H), lambda b: (b, 0, 0)),
        compiler_params=pltpu.CompilerParams(
            dimension_semantics=("parallel",)),
    )(seq, wq_t, bq2, wk_row, wv_t, bv2, bk1)


def attention_head_ref(seq, wq, bq, wk, bk, wv, bv):
    qh = jnp.tanh(seq @ wq.T + bq)               # (B, T, H)
    score = qh @ wk.T + bk                       # (B, T, 1)
    attn = jax.nn.softmax(score, axis=1)
    return (attn * seq) @ wv.T + bv


if __name__ == "__main__":
    B, T, H = 2, 8, 32                           # batch=2, seq=8, hidden=32
    key = jax.random.PRNGKey(0)
    ks = jax.random.split(key, 7)

    # Deterministic parameter init (PyTorch-Linear-like uniform scale).
    bound = 1.0 / jnp.sqrt(H)
    seq = jax.random.normal(ks[0], (B, T, H), jnp.float32)
    wq = jax.random.uniform(ks[1], (H, H), jnp.float32, -bound, bound)   # (out, in)
    bq = jax.random.uniform(ks[2], (H,), jnp.float32, -bound, bound)
    wk = jax.random.uniform(ks[3], (1, H), jnp.float32, -bound, bound)   # (out, in)
    bk = jax.random.uniform(ks[4], (1,), jnp.float32, -bound, bound)
    wv = jax.random.uniform(ks[5], (H, H), jnp.float32, -bound, bound)   # (out, in)
    bv = jax.random.uniform(ks[6], (H,), jnp.float32, -bound, bound)

    out = attention_head(seq, wq, bq, wk, bk, wv, bv)
    out = jax.block_until_ready(out)

    ref = attention_head_ref(seq, wq, bq, wk, bk, wv, bv)
    assert out.shape == (B, T, H)
    # Tolerance covers the EUP approximate reciprocal used for the softmax denom.
    assert jnp.allclose(out, ref, atol=5e-3, rtol=5e-3), "mismatch vs reference"

    print("KERNEL_OK")
</pallas_src>

<mosaic_0001>
module attributes {stable_mosaic.version = 11 : i64} {
  func.func @attention_head_kernel(%arg0: i32, %arg1: memref<2x8x32xf32, #tpu.memory_space<vmem>>, %arg2: memref<32x32xf32, #tpu.memory_space<vmem>>, %arg3: memref<1x32xf32, #tpu.memory_space<vmem>>, %arg4: memref<1x32xf32, #tpu.memory_space<vmem>>, %arg5: memref<32x32xf32, #tpu.memory_space<vmem>>, %arg6: memref<1x32xf32, #tpu.memory_space<vmem>>, %arg7: memref<1xf32, #tpu.memory_space<smem>>, %arg8: memref<2x8x32xf32, #tpu.memory_space<vmem>>) attributes {dimension_semantics = [#tpu.dimension_semantics<parallel>], iteration_bounds = array<i64: 1>, scalar_prefetch = 0 : i64, scratch_operands = 0 : i64, tpu.core_type = #tpu.core_type<tc>, window_params = [{transform_indices = @transform_0, window_bounds = array<i64: 2, 8, 32>}, {pipeline_mode = #tpu.pipeline_mode<synchronous>, transform_indices = @transform_1, window_bounds = array<i64: 32, 32>}, {pipeline_mode = #tpu.pipeline_mode<synchronous>, transform_indices = @transform_2, window_bounds = array<i64: 1, 32>}, {pipeline_mode = #tpu.pipeline_mode<synchronous>, transform_indices = @transform_3, window_bounds = array<i64: 1, 32>}, {pipeline_mode = #tpu.pipeline_mode<synchronous>, transform_indices = @transform_4, window_bounds = array<i64: 32, 32>}, {pipeline_mode = #tpu.pipeline_mode<synchronous>, transform_indices = @transform_5, window_bounds = array<i64: 1, 32>}, {transform_indices = @transform_6, window_bounds = array<i64: 1>}, {transform_indices = @transform_7, window_bounds = array<i64: 2, 8, 32>}]} {
    %c0 = arith.constant 0 : index
    %c0_0 = arith.constant 0 : index
    %c0_1 = arith.constant 0 : index
    %0 = vector.load %arg1[%c0, %c0_0, %c0_1] : memref<2x8x32xf32, #tpu.memory_space<vmem>>, vector<2x8x32xf32>
    %1 = vector.shape_cast %0 : vector<2x8x32xf32> to vector<16x32xf32>
    %c0_2 = arith.constant 0 : index
    %c0_3 = arith.constant 0 : index
    %2 = vector.load %arg2[%c0_2, %c0_3] : memref<32x32xf32, #tpu.memory_space<vmem>>, vector<32x32xf32>
    %cst = arith.constant dense<0.000000e+00> : vector<16x32xf32>
    %3 = tpu.matmul %1, %2, %cst {dimension_numbers = #tpu.dot_dimension_numbers<[1], [0], [0], [1], [0, 0, 1, 1], [], []>} : vector<16x32xf32>, vector<32x32xf32>, vector<16x32xf32> -> vector<16x32xf32>
    %c0_4 = arith.constant 0 : index
    %c0_5 = arith.constant 0 : index
    %4 = vector.load %arg3[%c0_4, %c0_5] : memref<1x32xf32, #tpu.memory_space<vmem>>, vector<1x32xf32>
    %5 = vector.broadcast %4 : vector<1x32xf32> to vector<16x32xf32>
    %6 = arith.addf %3, %5 : vector<16x32xf32>
    %7 = math.tanh %6 : vector<16x32xf32>
    %8 = vector.shape_cast %7 : vector<16x32xf32> to vector<2x8x32xf32>
    %c0_6 = arith.constant 0 : index
    %c0_7 = arith.constant 0 : index
    %9 = vector.load %arg4[%c0_6, %c0_7] : memref<1x32xf32, #tpu.memory_space<vmem>>, vector<1x32xf32>
    %10 = vector.shape_cast %9 : vector<1x32xf32> to vector<1x1x32xf32>
    %11 = vector.broadcast %10 : vector<1x1x32xf32> to vector<2x8x32xf32>
    %12 = arith.mulf %8, %11 : vector<2x8x32xf32>
    %cst_8 = arith.constant dense<0.000000e+00> : vector<2x8xf32>
    %13 = vector.multi_reduction <add>, %12, %cst_8 [2] : vector<2x8x32xf32> to vector<2x8xf32>
    %14 = vector.shape_cast %13 : vector<2x8xf32> to vector<2x8x1xf32>
    %c0_9 = arith.constant 0 : index
    %15 = memref.load %arg7[%c0_9] : memref<1xf32, #tpu.memory_space<smem>>
    %16 = vector.broadcast %15 : f32 to vector<2x8x1xf32>
    %17 = arith.addf %14, %16 : vector<2x8x1xf32>
    %cst_10 = arith.constant dense<0xFF800000> : vector<2x1xf32>
    %18 = vector.multi_reduction <maximumf>, %17, %cst_10 [1] : vector<2x8x1xf32> to vector<2x1xf32>
    %19 = vector.shape_cast %18 : vector<2x1xf32> to vector<2x1x1xf32>
    %20 = vector.broadcast %19 : vector<2x1x1xf32> to vector<2x8x1xf32>
    %21 = arith.subf %17, %20 : vector<2x8x1xf32>
    %22 = math.exp %21 : vector<2x8x1xf32>
    %cst_11 = arith.constant dense<0.000000e+00> : vector<2x1xf32>
    %23 = vector.multi_reduction <add>, %22, %cst_11 [1] : vector<2x8x1xf32> to vector<2x1xf32>
    %24 = vector.shape_cast %23 : vector<2x1xf32> to vector<2x1x1xf32>
    %25 = tpu.reciprocal %24 {approx = true} : vector<2x1x1xf32> -> vector<2x1x1xf32>
    %26 = vector.broadcast %25 : vector<2x1x1xf32> to vector<2x8x1xf32>
    %27 = arith.mulf %22, %26 : vector<2x8x1xf32>
    %28 = vector.broadcast %27 : vector<2x8x1xf32> to vector<2x8x32xf32>
    %29 = arith.mulf %28, %0 : vector<2x8x32xf32>
    %30 = vector.shape_cast %29 : vector<2x8x32xf32> to vector<16x32xf32>
    %c0_12 = arith.constant 0 : index
    %c0_13 = arith.constant 0 : index
    %31 = vector.load %arg5[%c0_12, %c0_13] : memref<32x32xf32, #tpu.memory_space<vmem>>, vector<32x32xf32>
    %cst_14 = arith.constant dense<0.000000e+00> : vector<16x32xf32>
    %32 = tpu.matmul %30, %31, %cst_14 {dimension_numbers = #tpu.dot_dimension_numbers<[1], [0], [0], [1], [0, 0, 1, 1], [], []>} : vector<16x32xf32>, vector<32x32xf32>, vector<16x32xf32> -> vector<16x32xf32>
    %c0_15 = arith.constant 0 : index
    %c0_16 = arith.constant 0 : index
    %33 = vector.load %arg6[%c0_15, %c0_16] : memref<1x32xf32, #tpu.memory_space<vmem>>, vector<1x32xf32>
    %34 = vector.broadcast %33 : vector<1x32xf32> to vector<16x32xf32>
    %35 = arith.addf %32, %34 : vector<16x32xf32>
    %36 = vector.shape_cast %35 : vector<16x32xf32> to vector<2x8x32xf32>
    %c0_17 = arith.constant 0 : index
    %c0_18 = arith.constant 0 : index
    %c0_19 = arith.constant 0 : index
    %37 = vector.load %arg8[%c0_17, %c0_18, %c0_19] : memref<2x8x32xf32, #tpu.memory_space<vmem>>, vector<2x8x32xf32>
    tpu.vector_store %arg8[%c0_17, %c0_18, %c0_19], %36 {strides = array<i32>} : memref<2x8x32xf32, #tpu.memory_space<vmem>>, vector<2x8x32xf32>,
    return
  }
  func.func @transform_0(%arg0: i32) -> (i32, i32, i32) {
    %c0_i32 = arith.constant 0 : i32
    %c0_i32_0 = arith.constant 0 : i32
    %c0_i32_1 = arith.constant 0 : i32
    return %arg0, %c0_i32, %c0_i32_0 : i32, i32, i32
  }
  func.func @transform_1(%arg0: i32) -> (i32, i32) {
    %c0_i32 = arith.constant 0 : i32
    %c0_i32_0 = arith.constant 0 : i32
    %c0_i32_1 = arith.constant 0 : i32
    return %c0_i32, %c0_i32_0 : i32, i32
  }
  func.func @transform_2(%arg0: i32) -> (i32, i32) {
    %c0_i32 = arith.constant 0 : i32
    %c0_i32_0 = arith.constant 0 : i32
    %c0_i32_1 = arith.constant 0 : i32
    return %c0_i32, %c0_i32_0 : i32, i32
  }
  func.func @transform_3(%arg0: i32) -> (i32, i32) {
    %c0_i32 = arith.constant 0 : i32
    %c0_i32_0 = arith.constant 0 : i32
    %c0_i32_1 = arith.constant 0 : i32
    return %c0_i32, %c0_i32_0 : i32, i32
  }
  func.func @transform_4(%arg0: i32) -> (i32, i32) {
    %c0_i32 = arith.constant 0 : i32
    %c0_i32_0 = arith.constant 0 : i32
    %c0_i32_1 = arith.constant 0 : i32
    return %c0_i32, %c0_i32_0 : i32, i32
  }
  func.func @transform_5(%arg0: i32) -> (i32, i32) {
    %c0_i32 = arith.constant 0 : i32
    %c0_i32_0 = arith.constant 0 : i32
    %c0_i32_1 = arith.constant 0 : i32
    return %c0_i32, %c0_i32_0 : i32, i32
  }
  func.func @transform_6(%arg0: i32) -> i32 {
    %c0_i32 = arith.constant 0 : i32
    %c0_i32_0 = arith.constant 0 : i32
    return %c0_i32 : i32
  }
  func.func @transform_7(%arg0: i32) -> (i32, i32, i32) {
    %c0_i32 = arith.constant 0 : i32
    %c0_i32_0 = arith.constant 0 : i32
    %c0_i32_1 = arith.constant 0 : i32
    return %arg0, %c0_i32, %c0_i32_0 : i32, i32, i32
  }
}

</mosaic_0001>

<llo_original>
// kernel: tpu_custom_call.1
$region0: #{tpu_custom_call.1}
  #allocation0 [shape = 'u32[]', space=smem, size = 0x4, offset = 0x4, fixed_abs, tag = 'smem constant byte address 0x4 - core index']
  #allocation1 [shape = 'u32[144,128]{1,0:T(1,128)}', space=vmem, size = 0x12000, scoped, tag = 'internal scratch']
  #allocation2 [shape = 'f32[1]{0:T(128)S(6)}', space=smem, size = 0x200, scoped, tag = 'scoped memory for tpu_custom_call.1']
  %s0 = inlined_call_operand.hbm [shape: f32[2,8,32], index: 0, kind: input, shape index: {}]
  %s1 = inlined_call_operand.hbm [shape: f32[32,32], index: 1, kind: input, shape index: {}]
  %s2 = inlined_call_operand.vmem [shape: f32[1,32], index: 2, kind: input, shape index: {}]
  %s3 = inlined_call_operand.vmem [shape: f32[1,32], index: 3, kind: input, shape index: {}]
  %s4 = inlined_call_operand.hbm [shape: f32[32,32], index: 4, kind: input, shape index: {}]
  %s5 = inlined_call_operand.vmem [shape: f32[1,32], index: 5, kind: input, shape index: {}]
  %s6 = inlined_call_operand.<no memory space> [shape: f32[1], index: 6, kind: input, shape index: {}]
  %s7 = inlined_call_operand.hbm [shape: f32[2,8,32], index: 7, kind: output, shape index: {}]
  %s8 = sld [smem:[#allocation0]]
  $region50: #{tpu_custom_call.1} parent=0
    _
  %s10 = ssub.s32 1, %s8
  %s11 = scalar_select 0, %s10, %s8
  %12 = sst [smem:[#allocation2]] %s6
  $region1: #{tpu_custom_call.1} parent=0
    #allocation3 [shape = 'u8[8192]{0}', space=vmem, size = 0x2000, scoped, tag = 'input window, operand 0, single buffered']
    #allocation4 [shape = 's32[1]{0}', space=sflag, size = 0x4, scoped, tag = 'scoped memory for tpu_custom_call.1']
    #allocation5 [shape = 's32[1]{0}', space=sflag, size = 0x4, scoped, tag = 'scoped memory for tpu_custom_call.1']
    #allocation6 [shape = 'u8[16384]{0}', space=vmem, size = 0x4000, scoped, tag = 'input window, operand 1, single buffered']
    #allocation7 [shape = 's32[1]{0}', space=sflag, size = 0x4, scoped, tag = 'scoped memory for tpu_custom_call.1']
    #allocation8 [shape = 'u8[16384]{0}', space=vmem, size = 0x4000, scoped, tag = 'input window, operand 4, single buffered']
    #allocation9 [shape = 'u8[8192]{0}', space=vmem, size = 0x2000, scoped, tag = 'output window, operand 0, single buffered']
    %13 = vsyncpa [#allocation4], 0
    %14 = vsyncpa [#allocation7], 0
    %15 = vsyncpa [#allocation5], 0
    // Predicated region
    $region2: #{tpu_custom_call.1} parent=1 // pred_check
      _
    $region3: #{tpu_custom_call.1} parent=1 // pred_check_branch
      %17 = sbr.rel (0) target = $region5
    $region4: #{tpu_custom_call.1} parent=1 // pred_region
      %s19 = ssub.s32 256, 256
      %20 = vsyncadd [#allocation4], %s19
      %s21 = sshll.u32 [#allocation3], 4
      %s22 = int_to_ptr.vmem [resolvable:$true] %s21
      %27 = dma.hbm_to_vmem [thread:$0]  %s0, 256, %s22, [#allocation4], 128, 128, 8
    $region5: #{tpu_custom_call.1} parent=1 // pred_fallthru
      _
    // Predicated region
    $region6: #{tpu_custom_call.1} parent=1 // pred_check
      _
    $region7: #{tpu_custom_call.1} parent=1 // pred_check_branch
      %29 = sbr.rel (0) target = $region9
    $region8: #{tpu_custom_call.1} parent=1 // pred_region
      %s31 = ssub.s32 512, 512
      %32 = vsyncadd [#allocation7], %s31
      %s33 = sshll.u32 [#allocation6], 4
      %s34 = int_to_ptr.vmem [resolvable:$true] %s33
      %39 = dma.hbm_to_vmem [thread:$0]  %s1, 512, %s34, [#allocation7], 128, 128, 8
    $region9: #{tpu_custom_call.1} parent=1 // pred_fallthru
      _
    // Predicated region
    $region10: #{tpu_custom_call.1} parent=1 // pred_check
      _
    $region11: #{tpu_custom_call.1} parent=1 // pred_check_branch
      %41 = sbr.rel (0) target = $region13
    $region12: #{tpu_custom_call.1} parent=1 // pred_region
      _
    $region13: #{tpu_custom_call.1} parent=1 // pred_fallthru
      _
    // Predicated region
    $region14: #{tpu_custom_call.1} parent=1 // pred_check
      _
    $region15: #{tpu_custom_call.1} parent=1 // pred_check_branch
      %43 = sbr.rel (0) target = $region17
    $region16: #{tpu_custom_call.1} parent=1 // pred_region
      _
    $region17: #{tpu_custom_call.1} parent=1 // pred_fallthru
      _
    // Predicated region
    $region18: #{tpu_custom_call.1} parent=1 // pred_check
      _
    $region19: #{tpu_custom_call.1} parent=1 // pred_check_branch
      %45 = sbr.rel (0) target = $region21
    $region20: #{tpu_custom_call.1} parent=1 // pred_region
      %s47 = ssub.s32 512, 512
      %48 = vsyncadd [#allocation7], %s47
      %s49 = sshll.u32 [#allocation8], 4
      %s50 = int_to_ptr.vmem [resolvable:$true] %s49
      %55 = dma.hbm_to_vmem [thread:$0]  %s4, 512, %s50, [#allocation7], 128, 128, 8
    $region21: #{tpu_custom_call.1} parent=1 // pred_fallthru
      _
    // Predicated region
    $region22: #{tpu_custom_call.1} parent=1 // pred_check
      _
    $region23: #{tpu_custom_call.1} parent=1 // pred_check_branch
      %57 = sbr.rel (0) target = $region25
    $region24: #{tpu_custom_call.1} parent=1 // pred_region
      _
    $region25: #{tpu_custom_call.1} parent=1 // pred_fallthru
      _
    // Predicated region
    $region26: #{tpu_custom_call.1} parent=1 // pred_check
      _
    $region27: #{tpu_custom_call.1} parent=1 // pred_check_branch
      %59 = sbr.rel (0) target = $region29
    $region28: #{tpu_custom_call.1} parent=1 // pred_region
      _
    $region29: #{tpu_custom_call.1} parent=1 // pred_fallthru
      _
    // Predicated region
    $region30: #{tpu_custom_call.1} parent=1 // pred_check
      _
    $region31: #{tpu_custom_call.1} parent=1 // pred_check_branch
      %61 = sbr.rel (0) target = $region33
    $region32: #{tpu_custom_call.1} parent=1 // pred_region
      %62 = dma.done [#allocation4], 256
    $region33: #{tpu_custom_call.1} parent=1 // pred_fallthru
      _
    // Predicated region
    $region34: #{tpu_custom_call.1} parent=1 // pred_check
      _
    $region35: #{tpu_custom_call.1} parent=1 // pred_check_branch
      %64 = sbr.rel (0) target = $region37
    $region36: #{tpu_custom_call.1} parent=1 // pred_region
      %65 = dma.done [#allocation7], 512
    $region37: #{tpu_custom_call.1} parent=1 // pred_fallthru
      _
    // Predicated region
    $region38: #{tpu_custom_call.1} parent=1 // pred_check
      _
    $region39: #{tpu_custom_call.1} parent=1 // pred_check_branch
      %67 = sbr.rel (0) target = $region41
    $region40: #{tpu_custom_call.1} parent=1 // pred_region
      %68 = dma.done [#allocation7], 512
    $region41: #{tpu_custom_call.1} parent=1 // pred_fallthru
      _
    %v69 = vld [vmem:[#allocation3] sm:$0xff]
    %v70 = vld [vmem:[#allocation3 + $0x8] sm:$0xff]
    %v71 = vld [vmem:[#allocation6] sm:$0xff]
    %v72 = vld [vmem:[#allocation6 + $0x8] sm:$0xff]
    %v73 = vld [vmem:[#allocation6 + $0x10] sm:$0xff]
    %v74 = vld [vmem:[#allocation6 + $0x18] sm:$0xff]
    %v75 = vld [vmem:[%s2] sm:$0x1]
    %v77 = vlaneseq
    %v78 = vshrl.u32 %v77, 7
    %v79 = vsub.s32 0, %v78
    %v80 = vrot.slane %v75, %v79
    %vm82 = vcmask 261120
    %v84 = vsel %vm82, %v69, 0
    %v87 = vsel %vm82, %v70, 0
    %89 = vmatprep.subr.mxu0 0.0
    %90 = vmatpush1.msra.mxu0 %v71
    %91 = vmatprep.subr.mxu0 0.0
    %92 = vmatpush1.msra.mxu0 %v72
    %93 = vmatprep.subr.mxu0 0.0
    %94 = vmatpush1.msra.mxu0 %v73
    %95 = vmatprep.subr.mxu0 0.0
    %96 = vmatpush1.msra.mxu0 %v74
    %97 = vmatprep.subr.mxu0 0.0
    %98 = vmatpush1.msra.mxu0 0.0
    %99 = vmatprep.subr.mxu0 0.0
    %100 = vmatpush1.msra.mxu0 0.0
    %101 = vmatprep.subr.mxu0 0.0
    %102 = vmatpush1.msra.mxu0 0.0
    %103 = vmatprep.subr.mxu0 0.0
    %104 = vmatpush1.msra.mxu0 0.0
    %105 = vmatprep.subr.mxu0 0.0
    %106 = vmatpush1.msra.mxu0 0.0
    %107 = vmatprep.subr.mxu0 0.0
    %108 = vmatpush1.msra.mxu0 0.0
    %109 = vmatprep.subr.mxu0 0.0
    %110 = vmatpush1.msra.mxu0 0.0
    %111 = vmatprep.subr.mxu0 0.0
    %112 = vmatpush1.msra.mxu0 0.0
    %113 = vmatprep.subr.mxu0 0.0
    %114 = vmatpush1.msra.mxu0 0.0
    %115 = vmatprep.subr.mxu0 0.0
    %116 = vmatpush1.msra.mxu0 0.0
    %117 = vmatprep.subr.mxu0 0.0
    %118 = vmatpush1.msra.mxu0 0.0
    %119 = vmatprep.subr.mxu0 0.0
    %120 = vmatpush1.msra.mxu0 0.0
    %121 = vmatprep.subr.mxu0 0.0
    %122 = vmatpush1.msra.mxu0 0.0
    %123 = vmatprep.subr.mxu0 0.0
    %124 = vmatpush1.msra.mxu0 0.0
    %125 = vmatprep.subr.mxu0 0.0
    %126 = vmatpush1.msra.mxu0 0.0
    %127 = vmatprep.subr.mxu0 0.0
    %128 = vmatpush1.msra.mxu0 0.0
    %129 = vmatprep.subr.mxu0 0.0
    %130 = vmatpush1.msra.mxu0 0.0
    %131 = vmatprep.subr.mxu0 0.0
    %132 = vmatpush1.msra.mxu0 0.0
    %133 = vmatprep.subr.mxu0 0.0
    %134 = vmatpush1.msra.mxu0 0.0
    %135 = vmatprep.subr.mxu0 0.0
    %136 = vmatpush1.msra.mxu0 0.0
    %137 = vmatprep.subr.mxu0 0.0
    %138 = vmatpush1.msra.mxu0 0.0
    %139 = vmatprep.subr.mxu0 0.0
    %140 = vmatpush1.msra.mxu0 0.0
    %141 = vmatprep.subr.mxu0 0.0
    %142 = vmatpush1.msra.mxu0 0.0
    %143 = vmatprep.subr.mxu0 0.0
    %144 = vmatpush1.msra.mxu0 0.0
    %145 = vmatprep.subr.mxu0 0.0
    %146 = vmatpush1.msra.mxu0 0.0
    %147 = vmatprep.subr.mxu0 0.0
    %148 = vmatpush1.msra.mxu0 0.0
    %149 = vmatprep.subr.mxu0 0.0
    %150 = vmatpush1.msra.mxu0 0.0
    %151 = vmatprep.subr.mxu0 0.0
    %152 = vmatpush1.msra.mxu0 0.0
    %153 = vmatprep.mubr.f32.mxu0 0.0
    %154 = vmatmul.mubr.f32.gmra.mrb[0].mxu0 %v84
    %v155 = vpop.f32.mrb[0].mxu0
    %v156 = vadd.f32 %v80, %v155
    %v157 = vpop.f32.mrb[0].mxu0
    %158 = vmatprep.mubr.f32.mxu0 0.0
    %159 = vmatmul.mubr.f32.gmra.mrb[0].mxu0 %v87
    %v160 = vpop.f32.mrb[0].mxu0
    %v161 = vadd.f32 %v80, %v160
    %v162 = vpop.f32.mrb[0].mxu0
    %163 = vdwg.mxu0
    %v164 = vtanh.pop %v156
    %v165 = vtanh.pop %v161
    %v166 = vld [vmem:[%s3] sm:$0x1]
    %v168 = vlaneseq
    %v169 = vshrl.u32 %v168, 7
    %v170 = vsub.s32 0, %v169
    %v171 = vrot.slane %v166, %v170
    %v173 = vmul.f32 %v164, %v171
    %v174 = vmul.f32 %v165, %v171
    %v175 = vsel %vm82, %v173, 0.0
    %176 = vadd.xlane.f32.xlu0 %v175
    %v177 = vpop.xlane.xlu0 %176
    %v178 = vsel %vm82, %v174, 0.0
    %179 = vadd.xlane.f32.xlu0 %v178
    %v180 = vpop.xlane.xlu0 %179
    %s181 = sld [smem:[#allocation2]]
    %v182 = vstv %s181
    %v183 = vadd.f32 %v177, %v182
    %v184 = vadd.f32 %v180, %v182
    %v185 = vrot.slane %v183, 4
    %v186 = vmax.f32 %v183, %v185
    %v187 = vrot.slane %v186, 2
    %v188 = vmax.f32 %v186, %v187
    %v189 = vrot.slane %v188, 1
    %v190 = vmax.f32 %v188, %v189
    %v191 = vrot.slane %v184, 4
    %v192 = vmax.f32 %v184, %v191
    %v193 = vrot.slane %v192, 2
    %v194 = vmax.f32 %v192, %v193
    %v195 = vrot.slane %v194, 1
    %v196 = vmax.f32 %v194, %v195
    %v197 = vsub.f32 %v183, %v190
    %v198 = vsub.f32 %v184, %v196
    %v199 = vmul.f32 %v197, 1.442695
    %v200 = vpow.pop %v199
    %v201 = vmul.f32 %v198, 1.442695
    %v202 = vpow.pop %v201
    %v203 = vrot.slane %v200, 4
    %v204 = vadd.f32 %v200, %v203
    %v205 = vrot.slane %v204, 2
    %v206 = vadd.f32 %v204, %v205
    %v207 = vrot.slane %v206, 1
    %v208 = vadd.f32 %v206, %v207
    %v209 = vrot.slane %v202, 4
    %v210 = vadd.f32 %v202, %v209
    %v211 = vrot.slane %v210, 2
    %v212 = vadd.f32 %v210, %v211
    %v213 = vrot.slane %v212, 1
    %v214 = vadd.f32 %v212, %v213
    %v215 = vrcp.pop %v208
    %v216 = vrcp.pop %v214
    %v217 = vmul.f32 %v200, %v215
    %v218 = vmul.f32 %v202, %v216
    %v219 = vmul.f32 %v217, %v69
    %v220 = vmul.f32 %v218, %v70
    %v221 = vld [vmem:[#allocation8] sm:$0xff]
    %v222 = vld [vmem:[#allocation8 + $0x8] sm:$0xff]
    %v223 = vld [vmem:[#allocation8 + $0x10] sm:$0xff]
    %v224 = vld [vmem:[#allocation8 + $0x18] sm:$0xff]
    %v225 = vld [vmem:[%s5] sm:$0x1]
    %v227 = vlaneseq
    %v228 = vshrl.u32 %v227, 7
    %v229 = vsub.s32 0, %v228
    %v230 = vrot.slane %v225, %v229
    %v233 = vsel %vm82, %v219, 0
    %v236 = vsel %vm82, %v220, 0
    %238 = vmatprep.subr.mxu0 0.0
    %239 = vmatpush1.msra.mxu0 %v221
    %240 = vmatprep.subr.mxu0 0.0
    %241 = vmatpush1.msra.mxu0 %v222
    %242 = vmatprep.subr.mxu0 0.0
    %243 = vmatpush1.msra.mxu0 %v223
    %244 = vmatprep.subr.mxu0 0.0
    %245 = vmatpush1.msra.mxu0 %v224
    %246 = vmatprep.subr.mxu0 0.0
    %247 = vmatpush1.msra.mxu0 0.0
    %248 = vmatprep.subr.mxu0 0.0
    %249 = vmatpush1.msra.mxu0 0.0
    %250 = vmatprep.subr.mxu0 0.0
    %251 = vmatpush1.msra.mxu0 0.0
    %252 = vmatprep.subr.mxu0 0.0
    %253 = vmatpush1.msra.mxu0 0.0
    %254 = vmatprep.subr.mxu0 0.0
    %255 = vmatpush1.msra.mxu0 0.0
    %256 = vmatprep.subr.mxu0 0.0
    %257 = vmatpush1.msra.mxu0 0.0
    %258 = vmatprep.subr.mxu0 0.0
    %259 = vmatpush1.msra.mxu0 0.0
    %260 = vmatprep.subr.mxu0 0.0
    %261 = vmatpush1.msra.mxu0 0.0
    %262 = vmatprep.subr.mxu0 0.0
    %263 = vmatpush1.msra.mxu0 0.0
    %264 = vmatprep.subr.mxu0 0.0
    %265 = vmatpush1.msra.mxu0 0.0
    %266 = vmatprep.subr.mxu0 0.0
    %267 = vmatpush1.msra.mxu0 0.0
    %268 = vmatprep.subr.mxu0 0.0
    %269 = vmatpush1.msra.mxu0 0.0
    %270 = vmatprep.subr.mxu0 0.0
    %271 = vmatpush1.msra.mxu0 0.0
    %272 = vmatprep.subr.mxu0 0.0
    %273 = vmatpush1.msra.mxu0 0.0
    %274 = vmatprep.subr.mxu0 0.0
    %275 = vmatpush1.msra.mxu0 0.0
    %276 = vmatprep.subr.mxu0 0.0
    %277 = vmatpush1.msra.mxu0 0.0
    %278 = vmatprep.subr.mxu0 0.0
    %279 = vmatpush1.msra.mxu0 0.0
    %280 = vmatprep.subr.mxu0 0.0
    %281 = vmatpush1.msra.mxu0 0.0
    %282 = vmatprep.subr.mxu0 0.0
    %283 = vmatpush1.msra.mxu0 0.0
    %284 = vmatprep.subr.mxu0 0.0
    %285 = vmatpush1.msra.mxu0 0.0
    %286 = vmatprep.subr.mxu0 0.0
    %287 = vmatpush1.msra.mxu0 0.0
    %288 = vmatprep.subr.mxu0 0.0
    %289 = vmatpush1.msra.mxu0 0.0
    %290 = vmatprep.subr.mxu0 0.0
    %291 = vmatpush1.msra.mxu0 0.0
    %292 = vmatprep.subr.mxu0 0.0
    %293 = vmatpush1.msra.mxu0 0.0
    %294 = vmatprep.subr.mxu0 0.0
    %295 = vmatpush1.msra.mxu0 0.0
    %296 = vmatprep.subr.mxu0 0.0
    %297 = vmatpush1.msra.mxu0 0.0
    %298 = vmatprep.subr.mxu0 0.0
    %299 = vmatpush1.msra.mxu0 0.0
    %300 = vmatprep.subr.mxu0 0.0
    %301 = vmatpush1.msra.mxu0 0.0
    %302 = vmatprep.mubr.f32.mxu0 0.0
    %303 = vmatmul.mubr.f32.gmra.mrb[0].mxu0 %v233
    %v304 = vpop.f32.mrb[0].mxu0
    %v305 = vadd.f32 %v230, %v304
    %v306 = vpop.f32.mrb[0].mxu0
    %307 = vmatprep.mubr.f32.mxu0 0.0
    %308 = vmatmul.mubr.f32.gmra.mrb[0].mxu0 %v236
    %v309 = vpop.f32.mrb[0].mxu0
    %v310 = vadd.f32 %v230, %v309
    %v311 = vpop.f32.mrb[0].mxu0
    %312 = vdwg.mxu0
    %313 = vst.msk [vmem:[#allocation9] sm:$0xff] %vm82, %v305
    %314 = vst.msk [vmem:[#allocation9 + $0x8] sm:$0xff] %vm82, %v310
    // Predicated region
    $region42: #{tpu_custom_call.1} parent=1 // pred_check
      _
    $region43: #{tpu_custom_call.1} parent=1 // pred_check_branch
      %316 = sbr.rel (0) target = $region45
    $region44: #{tpu_custom_call.1} parent=1 // pred_region
      %s318 = ssub.s32 256, 256
      %319 = vsyncadd [#allocation5], %s318
      %s320 = sshll.u32 [#allocation9], 4
      %s321 = int_to_ptr.vmem [resolvable:$true] %s320
      %326 = dma.vmem_to_hbm [thread:$0]  %s321, 256, %s7, [#allocation5], 128, 128, 8
    $region45: #{tpu_custom_call.1} parent=1 // pred_fallthru
      _
    // Predicated region
    $region46: #{tpu_custom_call.1} parent=1 // pred_check
      _
    $region47: #{tpu_custom_call.1} parent=1 // pred_check_branch
      %328 = sbr.rel (0) target = $region49
    $region48: #{tpu_custom_call.1} parent=1 // pred_region
      %329 = dma.done [#allocation5], 256
    $region49: #{tpu_custom_call.1} parent=1 // pred_fallthru
      _
    %330 = vsyncpa [#allocation4], 1
    %331 = vsyncpa [#allocation7], 1
    %332 = vsyncpa [#allocation5], 1

</llo_original>
